<compile_context>
chip_gen: v7x
topology: tpu7x:2x2x1
jax: 0.10.0
libtpu: 0.0.40
codegen_flags: <defaults>
</compile_context>

<pallas_src>
import numpy as np
import jax
import jax.numpy as jnp
from jax import lax
from jax.experimental import pallas as pl
from jax.experimental.pallas import tpu as pltpu


# ----------------------------- rampup glue (host-side scalars) ---------------
def sigmoid_rampup(current, rampup_length):
    if rampup_length == 0:
        return 1.0
    current = np.clip(current, 0.0, rampup_length)
    phase = 1.0 - current / rampup_length
    return float(np.exp(-5.0 * phase * phase))


def get_current_consistency_weight(epoch, consistency=1.0, consistency_rampup=40):
    return consistency * sigmoid_rampup(epoch, consistency_rampup)


# ----------------------------- in-kernel helpers ------------------------------
def _log_sigmoid(m):
    # stable log(sigmoid(m)) = min(m, 0) - log(1 + exp(-|m|))
    return jnp.minimum(m, 0.0) - jnp.log(1.0 + jnp.exp(-jnp.abs(m)))


def _binary_focal_terms(margin, valid_f):
    """Focal loss (gamma=2) for a 2-class head via the logit margin.

    margin = logit[target] - logit[other]. Returns (sum, count) as (1,1)."""
    logpt = _log_sigmoid(margin)
    pt = jnp.exp(logpt)
    omp = 1.0 - pt
    loss = -(omp * omp) * logpt
    return (jnp.sum(loss * valid_f, keepdims=True),
            jnp.sum(valid_f, keepdims=True))


def _multiclass_focal_terms(logits_cn, labels_1n):
    """Focal loss (gamma=2). logits (C, N): N on lanes, C on sublanes."""
    m = jnp.max(logits_cn, axis=0, keepdims=True)                     # (1, N)
    lse = m + jnp.log(jnp.sum(jnp.exp(logits_cn - m), axis=0, keepdims=True))
    logp = logits_cn - lse                                            # (C, N)
    cls = lax.broadcasted_iota(jnp.int32, logits_cn.shape, 0)
    onehot = (cls == labels_1n).astype(jnp.float32)   # label=-1 matches nothing
    logpt = jnp.sum(onehot * logp, axis=0, keepdims=True)             # (1, N)
    pt = jnp.exp(logpt)
    omp = 1.0 - pt
    loss = -(omp * omp) * logpt
    valid = (labels_1n != -1).astype(jnp.float32)
    return (jnp.sum(loss * valid, keepdims=True),
            jnp.sum(valid, keepdims=True))


def _full_spec(shape):
    # single grid step, block == whole array
    return pl.BlockSpec(shape, lambda i: (0,) * len(shape))


# ----------------------------- fused BLYXLoss forward -------------------------
def blyx_loss(batch, results):
    pred = results['pred'].astype(jnp.float32)                        # (B, 2)
    label = batch['label'].astype(jnp.int32)                          # (B,)
    B = pred.shape[0]

    include_rest = B > 1     # torch: early return after the main CE if B == 1

    # host-side python scalar -> baked into the trace (no SMEM input needed)
    cls_weight = 0.0
    if include_rest:
        cls_weight = 0.1 * (1.0 - get_current_consistency_weight(
            batch['epoch'], consistency=1.0, consistency_rampup=batch['epochs']))

    # --- layout plumbing (tiny XLA reshapes; keeps the kernel lane-dense) ----
    inputs = [pred.T, label.reshape(1, B)]                            # (2,B),(1,B)

    if include_rest:
        T = batch['os'].astype(jnp.float32).reshape(B)
        E = batch['os_censor'].astype(jnp.float32).reshape(B)
        flag = (results['blyx_flag'].reshape(B) != 0).astype(jnp.float32)
        bl = results['bl_com_feat'].astype(jnp.float32)               # (B, D)
        yx = results['yx_com_feat'].astype(jnp.float32)               # (B, D)
        inputs += [T.reshape(1, B), T.reshape(B, 1),
                   E.reshape(1, B), E.reshape(B, 1),
                   flag.reshape(1, B), flag.reshape(B, 1),
                   bl, yx]

    aux = []
    if include_rest:
        for key_p, key_l in (('lesions_pred', 'lesions_label'),
                             ('mask_bags_pred', 'mask_bags_label'),
                             ('mask_words_pred', 'mask_words_label')):
            p = results.get(key_p, None)
            if p is None:
                continue
            c = p.shape[-1]
            logits_t = p.reshape(-1, c).astype(jnp.float32).T         # (C, N)
            labels_r = batch[key_l].reshape(1, -1).astype(jnp.int32)  # (1, N)
            aux.append((logits_t, labels_r))
    n_aux = len(aux)
    for lg, lb in aux:
        inputs += [lg, lb]

    def kernel(*refs):
        out_ref = refs[-1]
        it = iter(refs[:-1])

        # ---- main binary focal loss on pred / label (label == -1 ignored) ---
        pred_t = next(it)[...]                                        # (2, B)
        labels = next(it)[...]                                        # (1, B)
        d_row = pred_t[0:1, :] - pred_t[1:2, :]                       # logit0-logit1
        valid = (labels != -1).astype(jnp.float32)
        margin = jnp.where(labels == 0, d_row, -d_row)
        s1, c1 = _binary_focal_terms(margin, valid)
        total = s1 / c1            # no NaN guard on the main term (matches torch)

        if include_rest:
            t_row = next(it)[...]; t_col = next(it)[...]
            e_row = next(it)[...]; e_col = next(it)[...]
            f_row = next(it)[...]; f_col = next(it)[...]
            bl_f = next(it)[...];  yx_f = next(it)[...]

            # ---- DeepSurv (Cox partial likelihood); risk = softmax(pred)[:,0]
            r_row = 1.0 / (1.0 + jnp.exp(-d_row))       # sigmoid(d) in (0,1): exp safe
            at_risk = (t_row >= t_col).astype(jnp.float32)   # (B,B): [i,j]=T_j>=T_i
            risk_set = jnp.sum(at_risk * jnp.exp(r_row), axis=-1,
                               keepdims=True)                          # (B, 1)
            s2 = (jnp.sum(e_row * r_row, keepdims=True)
                  - jnp.sum(e_col * jnp.log(risk_set), keepdims=True))
            c2 = jnp.sum(e_row, keepdims=True)
            loss2 = -(s2 / c2)
            # cnt==0 is the only way loss2 goes NaN -> same skip as torch isnan
            total = total + jnp.where(c2 > 0.0, loss2, 0.0)

            # ---- alignment: pairwise cosine + binary focal vs identity labels
            eps = 1e-8   # note: per-norm clamp (torch clamps the norm product)
            na = jnp.maximum(jnp.sqrt(jnp.sum(bl_f * bl_f, axis=-1, keepdims=True)), eps)
            nb = jnp.maximum(jnp.sqrt(jnp.sum(yx_f * yx_f, axis=-1, keepdims=True)), eps)
            cos = lax.dot_general(bl_f / na, yx_f / nb,
                                  (((1,), (1,)), ((), ())),
                                  preferred_element_type=jnp.float32)  # (B, B)
            d_align = 1.0 - 2.0 * cos      # logit0 - logit1 of stacked [1-cos, cos]
            ri = lax.broadcasted_iota(jnp.int32, cos.shape, 0)
            ci = lax.broadcasted_iota(jnp.int32, cos.shape, 1)
            margin3 = jnp.where(ri == ci, -d_align, d_align)           # label = eye
            pv = f_col * f_row               # mask == gather rows where flag != 0
            s3, c3 = _binary_focal_terms(margin3, pv)
            total = total + jnp.where(c3 > 0.0, s3 / c3, 0.0)

            # ---- aux multi-class focal heads, weighted by cls_weight --------
            aux_sum = jnp.zeros_like(total)
            for _ in range(n_aux):
                lg = next(it)[...]
                lb = next(it)[...]
                sa, ca = _multiclass_focal_terms(lg, lb)
                aux_sum = aux_sum + sa / ca
            total = total + cls_weight * aux_sum

        out_ref[...] = total

    out = pl.pallas_call(
        kernel,
        grid=(1,),
        in_specs=[_full_spec(x.shape) for x in inputs],
        out_specs=_full_spec((1, 1)),
        out_shape=jax.ShapeDtypeStruct((1, 1), jnp.float32),
        compiler_params=pltpu.CompilerParams(dimension_semantics=("arbitrary",)),
    )(*inputs)
    return out[0, 0]


# ----------------------------------- main ------------------------------------
if __name__ == "__main__":
    key = jax.random.PRNGKey(0)
    B, D, L, S = 8, 32, 6, 10
    ks = jax.random.split(key, 10)

    pred = jax.random.normal(ks[0], (B, 2), jnp.float32)
    label = jnp.array([0, 1, -1, 1, 0, -1, 1, 0], jnp.int32)
    os_t = jax.random.uniform(ks[1], (B,), jnp.float32, 1.0, 60.0)
    os_censor = jnp.array([1, 0, 1, 1, 0, 1, 0, 1], jnp.float32)
    blyx_flag = jnp.array([[1], [1], [0], [1], [1], [0], [1], [1]], jnp.int32)
    bl_com_feat = jax.random.normal(ks[2], (B, D), jnp.float32)
    yx_com_feat = jax.random.normal(ks[3], (B, D), jnp.float32)
    lesions_pred = jax.random.normal(ks[4], (B, L, 5), jnp.float32)
    lesions_label = jax.random.randint(ks[5], (B, L), -1, 5).astype(jnp.int32)
    mask_bags_pred = jax.random.normal(ks[6], (B, S, 4), jnp.float32)
    mask_bags_label = jax.random.randint(ks[7], (B, S), -1, 4).astype(jnp.int32)
    mask_words_pred = jax.random.normal(ks[8], (B, S, 4), jnp.float32)
    mask_words_label = jax.random.randint(ks[9], (B, S), -1, 4).astype(jnp.int32)

    batch = dict(label=label, os=os_t, os_censor=os_censor,
                 lesions_label=lesions_label,
                 mask_bags_label=mask_bags_label,
                 mask_words_label=mask_words_label,
                 epoch=10, epochs=40)
    results = dict(pred=pred, blyx_flag=blyx_flag,
                   bl_com_feat=bl_com_feat, yx_com_feat=yx_com_feat,
                   lesions_pred=lesions_pred,
                   mask_bags_pred=mask_bags_pred,
                   mask_words_pred=mask_words_pred)

    loss = blyx_loss(batch, results)
    jax.block_until_ready(loss)
    assert loss.shape == () and bool(jnp.isfinite(loss))
    print("KERNEL_OK")
</pallas_src>

<mosaic_0001>
module attributes {stable_mosaic.version = 11 : i64} {
  func.func @kernel(%arg0: i32, %arg1: memref<2x8xf32, #tpu.memory_space<vmem>>, %arg2: memref<1x8xi32, #tpu.memory_space<vmem>>, %arg3: memref<1x8xf32, #tpu.memory_space<vmem>>, %arg4: memref<8x1xf32, #tpu.memory_space<vmem>>, %arg5: memref<1x8xf32, #tpu.memory_space<vmem>>, %arg6: memref<8x1xf32, #tpu.memory_space<vmem>>, %arg7: memref<1x8xf32, #tpu.memory_space<vmem>>, %arg8: memref<8x1xf32, #tpu.memory_space<vmem>>, %arg9: memref<8x32xf32, #tpu.memory_space<vmem>>, %arg10: memref<8x32xf32, #tpu.memory_space<vmem>>, %arg11: memref<5x48xf32, #tpu.memory_space<vmem>>, %arg12: memref<1x48xi32, #tpu.memory_space<vmem>>, %arg13: memref<4x80xf32, #tpu.memory_space<vmem>>, %arg14: memref<1x80xi32, #tpu.memory_space<vmem>>, %arg15: memref<4x80xf32, #tpu.memory_space<vmem>>, %arg16: memref<1x80xi32, #tpu.memory_space<vmem>>, %arg17: memref<1x1xf32, #tpu.memory_space<vmem>>) attributes {dimension_semantics = [#tpu.dimension_semantics<arbitrary>], iteration_bounds = array<i64: 1>, scalar_prefetch = 0 : i64, scratch_operands = 0 : i64, tpu.core_type = #tpu.core_type<tc>, window_params = [{pipeline_mode = #tpu.pipeline_mode<synchronous>, transform_indices = @transform_0, window_bounds = array<i64: 2, 8>}, {pipeline_mode = #tpu.pipeline_mode<synchronous>, transform_indices = @transform_1, window_bounds = array<i64: 1, 8>}, {pipeline_mode = #tpu.pipeline_mode<synchronous>, transform_indices = @transform_2, window_bounds = array<i64: 1, 8>}, {pipeline_mode = #tpu.pipeline_mode<synchronous>, transform_indices = @transform_3, window_bounds = array<i64: 8, 1>}, {pipeline_mode = #tpu.pipeline_mode<synchronous>, transform_indices = @transform_4, window_bounds = array<i64: 1, 8>}, {pipeline_mode = #tpu.pipeline_mode<synchronous>, transform_indices = @transform_5, window_bounds = array<i64: 8, 1>}, {pipeline_mode = #tpu.pipeline_mode<synchronous>, transform_indices = @transform_6, window_bounds = array<i64: 1, 8>}, {pipeline_mode = #tpu.pipeline_mode<synchronous>, transform_indices = @transform_7, window_bounds = array<i64: 8, 1>}, {pipeline_mode = #tpu.pipeline_mode<synchronous>, transform_indices = @transform_8, window_bounds = array<i64: 8, 32>}, {pipeline_mode = #tpu.pipeline_mode<synchronous>, transform_indices = @transform_9, window_bounds = array<i64: 8, 32>}, {pipeline_mode = #tpu.pipeline_mode<synchronous>, transform_indices = @transform_10, window_bounds = array<i64: 5, 48>}, {pipeline_mode = #tpu.pipeline_mode<synchronous>, transform_indices = @transform_11, window_bounds = array<i64: 1, 48>}, {pipeline_mode = #tpu.pipeline_mode<synchronous>, transform_indices = @transform_12, window_bounds = array<i64: 4, 80>}, {pipeline_mode = #tpu.pipeline_mode<synchronous>, transform_indices = @transform_13, window_bounds = array<i64: 1, 80>}, {pipeline_mode = #tpu.pipeline_mode<synchronous>, transform_indices = @transform_14, window_bounds = array<i64: 4, 80>}, {pipeline_mode = #tpu.pipeline_mode<synchronous>, transform_indices = @transform_15, window_bounds = array<i64: 1, 80>}, {pipeline_mode = #tpu.pipeline_mode<synchronous>, transform_indices = @transform_16, window_bounds = array<i64: 1, 1>}]} {
    %c0 = arith.constant 0 : index
    %c0_0 = arith.constant 0 : index
    %0 = vector.load %arg1[%c0, %c0_0] : memref<2x8xf32, #tpu.memory_space<vmem>>, vector<2x8xf32>
    %c0_1 = arith.constant 0 : index
    %c0_2 = arith.constant 0 : index
    %1 = vector.load %arg2[%c0_1, %c0_2] : memref<1x8xi32, #tpu.memory_space<vmem>>, vector<1x8xi32>
    %2 = vector.extract_strided_slice %0 {offsets = [0, 0], sizes = [1, 8], strides = [1, 1]} : vector<2x8xf32> to vector<1x8xf32>
    %3 = vector.extract_strided_slice %0 {offsets = [1, 0], sizes = [1, 8], strides = [1, 1]} : vector<2x8xf32> to vector<1x8xf32>
    %4 = arith.subf %2, %3 : vector<1x8xf32>
    %c-1_i32 = arith.constant -1 : i32
    %5 = vector.broadcast %c-1_i32 : i32 to vector<1x8xi32>
    %6 = arith.cmpi ne, %1, %5 : vector<1x8xi32>
    %7 = arith.extui %6 : vector<1x8xi1> to vector<1x8xi32>
    %8 = arith.sitofp %7 : vector<1x8xi32> to vector<1x8xf32>
    %c0_i32 = arith.constant 0 : i32
    %9 = vector.broadcast %c0_i32 : i32 to vector<1x8xi32>
    %10 = arith.cmpi eq, %1, %9 : vector<1x8xi32>
    %cst = arith.constant 0.000000e+00 : f32
    %11 = vector.broadcast %cst : f32 to vector<1x8xf32>
    %12 = arith.subf %11, %4 : vector<1x8xf32>
    %13 = arith.select %10, %4, %12 : vector<1x8xi1>, vector<1x8xf32>
    %cst_3 = arith.constant 0.000000e+00 : f32
    %14 = vector.broadcast %cst_3 : f32 to vector<1x8xf32>
    %15 = arith.minimumf %13, %14 : vector<1x8xf32>
    %16 = math.absf %13 : vector<1x8xf32>
    %cst_4 = arith.constant 0.000000e+00 : f32
    %17 = vector.broadcast %cst_4 : f32 to vector<1x8xf32>
    %18 = arith.subf %17, %16 : vector<1x8xf32>
    %19 = math.exp %18 : vector<1x8xf32>
    %cst_5 = arith.constant 1.000000e+00 : f32
    %20 = vector.broadcast %cst_5 : f32 to vector<1x8xf32>
    %21 = arith.addf %20, %19 : vector<1x8xf32>
    %22 = math.log %21 : vector<1x8xf32>
    %23 = arith.subf %15, %22 : vector<1x8xf32>
    %24 = math.exp %23 : vector<1x8xf32>
    %cst_6 = arith.constant 1.000000e+00 : f32
    %25 = vector.broadcast %cst_6 : f32 to vector<1x8xf32>
    %26 = arith.subf %25, %24 : vector<1x8xf32>
    %27 = arith.mulf %26, %26 : vector<1x8xf32>
    %cst_7 = arith.constant 0.000000e+00 : f32
    %28 = vector.broadcast %cst_7 : f32 to vector<1x8xf32>
    %29 = arith.subf %28, %27 : vector<1x8xf32>
    %30 = arith.mulf %29, %23 : vector<1x8xf32>
    %31 = arith.mulf %30, %8 : vector<1x8xf32>
    %32 = vector.shape_cast %31 : vector<1x8xf32> to vector<1x1x8xf32>
    %cst_8 = arith.constant dense<0.000000e+00> : vector<1xf32>
    %33 = vector.multi_reduction <add>, %32, %cst_8 [1, 2] : vector<1x1x8xf32> to vector<1xf32>
    %34 = vector.shape_cast %33 : vector<1xf32> to vector<1x1x1xf32>
    %35 = vector.extract %34[0, 0, 0] : f32 from vector<1x1x1xf32>
    %36 = vector.broadcast %35 : f32 to vector<1x1xf32>
    %37 = vector.shape_cast %8 : vector<1x8xf32> to vector<1x1x8xf32>
    %cst_9 = arith.constant dense<0.000000e+00> : vector<1xf32>
    %38 = vector.multi_reduction <add>, %37, %cst_9 [1, 2] : vector<1x1x8xf32> to vector<1xf32>
    %39 = vector.shape_cast %38 : vector<1xf32> to vector<1x1x1xf32>
    %40 = vector.extract %39[0, 0, 0] : f32 from vector<1x1x1xf32>
    %41 = vector.broadcast %40 : f32 to vector<1x1xf32>
    %42 = arith.divf %36, %41 : vector<1x1xf32>
    %c0_10 = arith.constant 0 : index
    %c0_11 = arith.constant 0 : index
    %43 = vector.load %arg3[%c0_10, %c0_11] : memref<1x8xf32, #tpu.memory_space<vmem>>, vector<1x8xf32>
    %c0_12 = arith.constant 0 : index
    %c0_13 = arith.constant 0 : index
    %44 = vector.load %arg4[%c0_12, %c0_13] : memref<8x1xf32, #tpu.memory_space<vmem>>, vector<8x1xf32>
    %c0_14 = arith.constant 0 : index
    %c0_15 = arith.constant 0 : index
    %45 = vector.load %arg5[%c0_14, %c0_15] : memref<1x8xf32, #tpu.memory_space<vmem>>, vector<1x8xf32>
    %c0_16 = arith.constant 0 : index
    %c0_17 = arith.constant 0 : index
    %46 = vector.load %arg6[%c0_16, %c0_17] : memref<8x1xf32, #tpu.memory_space<vmem>>, vector<8x1xf32>
    %c0_18 = arith.constant 0 : index
    %c0_19 = arith.constant 0 : index
    %47 = vector.load %arg7[%c0_18, %c0_19] : memref<1x8xf32, #tpu.memory_space<vmem>>, vector<1x8xf32>
    %c0_20 = arith.constant 0 : index
    %c0_21 = arith.constant 0 : index
    %48 = vector.load %arg8[%c0_20, %c0_21] : memref<8x1xf32, #tpu.memory_space<vmem>>, vector<8x1xf32>
    %c0_22 = arith.constant 0 : index
    %c0_23 = arith.constant 0 : index
    %49 = vector.load %arg9[%c0_22, %c0_23] : memref<8x32xf32, #tpu.memory_space<vmem>>, vector<8x32xf32>
    %c0_24 = arith.constant 0 : index
    %c0_25 = arith.constant 0 : index
    %50 = vector.load %arg10[%c0_24, %c0_25] : memref<8x32xf32, #tpu.memory_space<vmem>>, vector<8x32xf32>
    %cst_26 = arith.constant 0.000000e+00 : f32
    %51 = vector.broadcast %cst_26 : f32 to vector<1x8xf32>
    %52 = arith.subf %51, %4 : vector<1x8xf32>
    %53 = math.exp %52 : vector<1x8xf32>
    %cst_27 = arith.constant 1.000000e+00 : f32
    %54 = vector.broadcast %cst_27 : f32 to vector<1x8xf32>
    %55 = arith.addf %54, %53 : vector<1x8xf32>
    %cst_28 = arith.constant 1.000000e+00 : f32
    %56 = vector.broadcast %cst_28 : f32 to vector<1x8xf32>
    %57 = arith.divf %56, %55 : vector<1x8xf32>
    %58 = vector.broadcast %43 : vector<1x8xf32> to vector<8x8xf32>
    %59 = vector.broadcast %44 : vector<8x1xf32> to vector<8x8xf32>
    %60 = arith.cmpf oge, %58, %59 : vector<8x8xf32>
    %61 = arith.extui %60 : vector<8x8xi1> to vector<8x8xi32>
    %62 = arith.sitofp %61 : vector<8x8xi32> to vector<8x8xf32>
    %63 = math.exp %57 : vector<1x8xf32>
    %64 = vector.broadcast %63 : vector<1x8xf32> to vector<8x8xf32>
    %65 = arith.mulf %62, %64 : vector<8x8xf32>
    %cst_29 = arith.constant dense<0.000000e+00> : vector<8xf32>
    %66 = vector.multi_reduction <add>, %65, %cst_29 [1] : vector<8x8xf32> to vector<8xf32>
    %67 = vector.shape_cast %66 : vector<8xf32> to vector<8x1xf32>
    %68 = arith.mulf %45, %57 : vector<1x8xf32>
    %69 = vector.shape_cast %68 : vector<1x8xf32> to vector<1x1x8xf32>
    %cst_30 = arith.constant dense<0.000000e+00> : vector<1xf32>
    %70 = vector.multi_reduction <add>, %69, %cst_30 [1, 2] : vector<1x1x8xf32> to vector<1xf32>
    %71 = vector.shape_cast %70 : vector<1xf32> to vector<1x1x1xf32>
    %72 = vector.extract %71[0, 0, 0] : f32 from vector<1x1x1xf32>
    %73 = vector.broadcast %72 : f32 to vector<1x1xf32>
    %74 = math.log %67 : vector<8x1xf32>
    %75 = arith.mulf %46, %74 : vector<8x1xf32>
    %76 = vector.shape_cast %75 : vector<8x1xf32> to vector<1x8x1xf32>
    %cst_31 = arith.constant dense<0.000000e+00> : vector<1xf32>
    %77 = vector.multi_reduction <add>, %76, %cst_31 [1, 2] : vector<1x8x1xf32> to vector<1xf32>
    %78 = vector.shape_cast %77 : vector<1xf32> to vector<1x1x1xf32>
    %79 = vector.extract %78[0, 0, 0] : f32 from vector<1x1x1xf32>
    %80 = vector.broadcast %79 : f32 to vector<1x1xf32>
    %81 = arith.subf %73, %80 : vector<1x1xf32>
    %82 = vector.shape_cast %45 : vector<1x8xf32> to vector<1x1x8xf32>
    %cst_32 = arith.constant dense<0.000000e+00> : vector<1xf32>
    %83 = vector.multi_reduction <add>, %82, %cst_32 [1, 2] : vector<1x1x8xf32> to vector<1xf32>
    %84 = vector.shape_cast %83 : vector<1xf32> to vector<1x1x1xf32>
    %85 = vector.extract %84[0, 0, 0] : f32 from vector<1x1x1xf32>
    %86 = vector.broadcast %85 : f32 to vector<1x1xf32>
    %87 = arith.divf %81, %86 : vector<1x1xf32>
    %cst_33 = arith.constant 0.000000e+00 : f32
    %88 = vector.broadcast %cst_33 : f32 to vector<1x1xf32>
    %89 = arith.subf %88, %87 : vector<1x1xf32>
    %cst_34 = arith.constant 0.000000e+00 : f32
    %90 = vector.broadcast %cst_34 : f32 to vector<1x1xf32>
    %91 = arith.cmpf ogt, %86, %90 : vector<1x1xf32>
    %cst_35 = arith.constant 0.000000e+00 : f32
    %92 = vector.broadcast %cst_35 : f32 to vector<1x1xf32>
    %93 = arith.select %91, %89, %92 : vector<1x1xi1>, vector<1x1xf32>
    %94 = arith.addf %42, %93 : vector<1x1xf32>
    %95 = arith.mulf %49, %49 : vector<8x32xf32>
    %cst_36 = arith.constant dense<0.000000e+00> : vector<8xf32>
    %96 = vector.multi_reduction <add>, %95, %cst_36 [1] : vector<8x32xf32> to vector<8xf32>
    %97 = vector.shape_cast %96 : vector<8xf32> to vector<8x1xf32>
    %98 = math.sqrt %97 : vector<8x1xf32>
    %cst_37 = arith.constant 9.99999993E-9 : f32
    %99 = vector.broadcast %cst_37 : f32 to vector<8x1xf32>
    %100 = arith.maximumf %98, %99 : vector<8x1xf32>
    %101 = arith.mulf %50, %50 : vector<8x32xf32>
    %cst_38 = arith.constant dense<0.000000e+00> : vector<8xf32>
    %102 = vector.multi_reduction <add>, %101, %cst_38 [1] : vector<8x32xf32> to vector<8xf32>
    %103 = vector.shape_cast %102 : vector<8xf32> to vector<8x1xf32>
    %104 = math.sqrt %103 : vector<8x1xf32>
    %cst_39 = arith.constant 9.99999993E-9 : f32
    %105 = vector.broadcast %cst_39 : f32 to vector<8x1xf32>
    %106 = arith.maximumf %104, %105 : vector<8x1xf32>
    %107 = vector.broadcast %100 : vector<8x1xf32> to vector<8x32xf32>
    %108 = arith.divf %49, %107 : vector<8x32xf32>
    %109 = vector.broadcast %106 : vector<8x1xf32> to vector<8x32xf32>
    %110 = arith.divf %50, %109 : vector<8x32xf32>
    %cst_40 = arith.constant dense<0.000000e+00> : vector<8x8xf32>
    %111 = tpu.matmul %108, %110, %cst_40 {dimension_numbers = #tpu.dot_dimension_numbers<[1], [1], [0], [0], [0, 0, 1, 0], [], []>} : vector<8x32xf32>, vector<8x32xf32>, vector<8x8xf32> -> vector<8x8xf32>
    %cst_41 = arith.constant 2.000000e+00 : f32
    %112 = vector.broadcast %cst_41 : f32 to vector<8x8xf32>
    %113 = arith.mulf %112, %111 : vector<8x8xf32>
    %cst_42 = arith.constant 1.000000e+00 : f32
    %114 = vector.broadcast %cst_42 : f32 to vector<8x8xf32>
    %115 = arith.subf %114, %113 : vector<8x8xf32>
    %116 = tpu.iota {dimensions = array<i32: 0>} : vector<8x8xi32>
    %117 = tpu.iota {dimensions = array<i32: 1>} : vector<8x8xi32>
    %118 = arith.cmpi eq, %116, %117 : vector<8x8xi32>
    %cst_43 = arith.constant 0.000000e+00 : f32
    %119 = vector.broadcast %cst_43 : f32 to vector<8x8xf32>
    %120 = arith.subf %119, %115 : vector<8x8xf32>
    %121 = arith.select %118, %120, %115 : vector<8x8xi1>, vector<8x8xf32>
    %122 = vector.broadcast %48 : vector<8x1xf32> to vector<8x8xf32>
    %123 = vector.broadcast %47 : vector<1x8xf32> to vector<8x8xf32>
    %124 = arith.mulf %122, %123 : vector<8x8xf32>
    %cst_44 = arith.constant 0.000000e+00 : f32
    %125 = vector.broadcast %cst_44 : f32 to vector<8x8xf32>
    %126 = arith.minimumf %121, %125 : vector<8x8xf32>
    %127 = math.absf %121 : vector<8x8xf32>
    %cst_45 = arith.constant 0.000000e+00 : f32
    %128 = vector.broadcast %cst_45 : f32 to vector<8x8xf32>
    %129 = arith.subf %128, %127 : vector<8x8xf32>
    %130 = math.exp %129 : vector<8x8xf32>
    %cst_46 = arith.constant 1.000000e+00 : f32
    %131 = vector.broadcast %cst_46 : f32 to vector<8x8xf32>
    %132 = arith.addf %131, %130 : vector<8x8xf32>
    %133 = math.log %132 : vector<8x8xf32>
    %134 = arith.subf %126, %133 : vector<8x8xf32>
    %135 = math.exp %134 : vector<8x8xf32>
    %cst_47 = arith.constant 1.000000e+00 : f32
    %136 = vector.broadcast %cst_47 : f32 to vector<8x8xf32>
    %137 = arith.subf %136, %135 : vector<8x8xf32>
    %138 = arith.mulf %137, %137 : vector<8x8xf32>
    %cst_48 = arith.constant 0.000000e+00 : f32
    %139 = vector.broadcast %cst_48 : f32 to vector<8x8xf32>
    %140 = arith.subf %139, %138 : vector<8x8xf32>
    %141 = arith.mulf %140, %134 : vector<8x8xf32>
    %142 = arith.mulf %141, %124 : vector<8x8xf32>
    %143 = vector.shape_cast %142 : vector<8x8xf32> to vector<1x8x8xf32>
    %cst_49 = arith.constant dense<0.000000e+00> : vector<1xf32>
    %144 = vector.multi_reduction <add>, %143, %cst_49 [1, 2] : vector<1x8x8xf32> to vector<1xf32>
    %145 = vector.shape_cast %144 : vector<1xf32> to vector<1x1x1xf32>
    %146 = vector.extract %145[0, 0, 0] : f32 from vector<1x1x1xf32>
    %147 = vector.broadcast %146 : f32 to vector<1x1xf32>
    %148 = vector.shape_cast %124 : vector<8x8xf32> to vector<1x8x8xf32>
    %cst_50 = arith.constant dense<0.000000e+00> : vector<1xf32>
    %149 = vector.multi_reduction <add>, %148, %cst_50 [1, 2] : vector<1x8x8xf32> to vector<1xf32>
    %150 = vector.shape_cast %149 : vector<1xf32> to vector<1x1x1xf32>
    %151 = vector.extract %150[0, 0, 0] : f32 from vector<1x1x1xf32>
    %152 = vector.broadcast %151 : f32 to vector<1x1xf32>
    %cst_51 = arith.constant 0.000000e+00 : f32
    %153 = vector.broadcast %cst_51 : f32 to vector<1x1xf32>
    %154 = arith.cmpf ogt, %152, %153 : vector<1x1xf32>
    %155 = arith.divf %147, %152 : vector<1x1xf32>
    %cst_52 = arith.constant 0.000000e+00 : f32
    %156 = vector.broadcast %cst_52 : f32 to vector<1x1xf32>
    %157 = arith.select %154, %155, %156 : vector<1x1xi1>, vector<1x1xf32>
    %158 = arith.addf %94, %157 : vector<1x1xf32>
    %cst_53 = arith.constant 0.000000e+00 : f32
    %159 = vector.broadcast %cst_53 : f32 to vector<1x1xf32>
    %c0_54 = arith.constant 0 : index
    %c0_55 = arith.constant 0 : index
    %160 = vector.load %arg11[%c0_54, %c0_55] : memref<5x48xf32, #tpu.memory_space<vmem>>, vector<5x48xf32>
    %c0_56 = arith.constant 0 : index
    %c0_57 = arith.constant 0 : index
    %161 = vector.load %arg12[%c0_56, %c0_57] : memref<1x48xi32, #tpu.memory_space<vmem>>, vector<1x48xi32>
    %cst_58 = arith.constant dense<0xFF800000> : vector<48xf32>
    %162 = vector.multi_reduction <maximumf>, %160, %cst_58 [0] : vector<5x48xf32> to vector<48xf32>
    %163 = vector.shape_cast %162 : vector<48xf32> to vector<1x48xf32>
    %164 = vector.broadcast %163 : vector<1x48xf32> to vector<5x48xf32>
    %165 = arith.subf %160, %164 : vector<5x48xf32>
    %166 = math.exp %165 : vector<5x48xf32>
    %cst_59 = arith.constant dense<0.000000e+00> : vector<48xf32>
    %167 = vector.multi_reduction <add>, %166, %cst_59 [0] : vector<5x48xf32> to vector<48xf32>
    %168 = vector.shape_cast %167 : vector<48xf32> to vector<1x48xf32>
    %169 = math.log %168 : vector<1x48xf32>
    %170 = arith.addf %163, %169 : vector<1x48xf32>
    %171 = vector.broadcast %170 : vector<1x48xf32> to vector<5x48xf32>
    %172 = arith.subf %160, %171 : vector<5x48xf32>
    %173 = tpu.iota {dimensions = array<i32: 0>} : vector<5x48xi32>
    %174 = vector.broadcast %161 : vector<1x48xi32> to vector<5x48xi32>
    %175 = arith.cmpi eq, %173, %174 : vector<5x48xi32>
    %176 = arith.extui %175 : vector<5x48xi1> to vector<5x48xi32>
    %177 = arith.sitofp %176 : vector<5x48xi32> to vector<5x48xf32>
    %178 = arith.mulf %177, %172 : vector<5x48xf32>
    %cst_60 = arith.constant dense<0.000000e+00> : vector<48xf32>
    %179 = vector.multi_reduction <add>, %178, %cst_60 [0] : vector<5x48xf32> to vector<48xf32>
    %180 = vector.shape_cast %179 : vector<48xf32> to vector<1x48xf32>
    %181 = math.exp %180 : vector<1x48xf32>
    %cst_61 = arith.constant 1.000000e+00 : f32
    %182 = vector.broadcast %cst_61 : f32 to vector<1x48xf32>
    %183 = arith.subf %182, %181 : vector<1x48xf32>
    %184 = arith.mulf %183, %183 : vector<1x48xf32>
    %cst_62 = arith.constant 0.000000e+00 : f32
    %185 = vector.broadcast %cst_62 : f32 to vector<1x48xf32>
    %186 = arith.subf %185, %184 : vector<1x48xf32>
    %187 = arith.mulf %186, %180 : vector<1x48xf32>
    %c-1_i32_63 = arith.constant -1 : i32
    %188 = vector.broadcast %c-1_i32_63 : i32 to vector<1x48xi32>
    %189 = arith.cmpi ne, %161, %188 : vector<1x48xi32>
    %190 = arith.extui %189 : vector<1x48xi1> to vector<1x48xi32>
    %191 = arith.sitofp %190 : vector<1x48xi32> to vector<1x48xf32>
    %192 = arith.mulf %187, %191 : vector<1x48xf32>
    %193 = vector.shape_cast %192 : vector<1x48xf32> to vector<1x1x48xf32>
    %cst_64 = arith.constant dense<0.000000e+00> : vector<1xf32>
    %194 = vector.multi_reduction <add>, %193, %cst_64 [1, 2] : vector<1x1x48xf32> to vector<1xf32>
    %195 = vector.shape_cast %194 : vector<1xf32> to vector<1x1x1xf32>
    %196 = vector.extract %195[0, 0, 0] : f32 from vector<1x1x1xf32>
    %197 = vector.broadcast %196 : f32 to vector<1x1xf32>
    %198 = vector.shape_cast %191 : vector<1x48xf32> to vector<1x1x48xf32>
    %cst_65 = arith.constant dense<0.000000e+00> : vector<1xf32>
    %199 = vector.multi_reduction <add>, %198, %cst_65 [1, 2] : vector<1x1x48xf32> to vector<1xf32>
    %200 = vector.shape_cast %199 : vector<1xf32> to vector<1x1x1xf32>
    %201 = vector.extract %200[0, 0, 0] : f32 from vector<1x1x1xf32>
    %202 = vector.broadcast %201 : f32 to vector<1x1xf32>
    %203 = arith.divf %197, %202 : vector<1x1xf32>
    %204 = arith.addf %159, %203 : vector<1x1xf32>
    %c0_66 = arith.constant 0 : index
    %c0_67 = arith.constant 0 : index
    %205 = vector.load %arg13[%c0_66, %c0_67] : memref<4x80xf32, #tpu.memory_space<vmem>>, vector<4x80xf32>
    %c0_68 = arith.constant 0 : index
    %c0_69 = arith.constant 0 : index
    %206 = vector.load %arg14[%c0_68, %c0_69] : memref<1x80xi32, #tpu.memory_space<vmem>>, vector<1x80xi32>
    %cst_70 = arith.constant dense<0xFF800000> : vector<80xf32>
    %207 = vector.multi_reduction <maximumf>, %205, %cst_70 [0] : vector<4x80xf32> to vector<80xf32>
    %208 = vector.shape_cast %207 : vector<80xf32> to vector<1x80xf32>
    %209 = vector.broadcast %208 : vector<1x80xf32> to vector<4x80xf32>
    %210 = arith.subf %205, %209 : vector<4x80xf32>
    %211 = math.exp %210 : vector<4x80xf32>
    %cst_71 = arith.constant dense<0.000000e+00> : vector<80xf32>
    %212 = vector.multi_reduction <add>, %211, %cst_71 [0] : vector<4x80xf32> to vector<80xf32>
    %213 = vector.shape_cast %212 : vector<80xf32> to vector<1x80xf32>
    %214 = math.log %213 : vector<1x80xf32>
    %215 = arith.addf %208, %214 : vector<1x80xf32>
    %216 = vector.broadcast %215 : vector<1x80xf32> to vector<4x80xf32>
    %217 = arith.subf %205, %216 : vector<4x80xf32>
    %218 = tpu.iota {dimensions = array<i32: 0>} : vector<4x80xi32>
    %219 = vector.broadcast %206 : vector<1x80xi32> to vector<4x80xi32>
    %220 = arith.cmpi eq, %218, %219 : vector<4x80xi32>
    %221 = arith.extui %220 : vector<4x80xi1> to vector<4x80xi32>
    %222 = arith.sitofp %221 : vector<4x80xi32> to vector<4x80xf32>
    %223 = arith.mulf %222, %217 : vector<4x80xf32>
    %cst_72 = arith.constant dense<0.000000e+00> : vector<80xf32>
    %224 = vector.multi_reduction <add>, %223, %cst_72 [0] : vector<4x80xf32> to vector<80xf32>
    %225 = vector.shape_cast %224 : vector<80xf32> to vector<1x80xf32>
    %226 = math.exp %225 : vector<1x80xf32>
    %cst_73 = arith.constant 1.000000e+00 : f32
    %227 = vector.broadcast %cst_73 : f32 to vector<1x80xf32>
    %228 = arith.subf %227, %226 : vector<1x80xf32>
    %229 = arith.mulf %228, %228 : vector<1x80xf32>
    %cst_74 = arith.constant 0.000000e+00 : f32
    %230 = vector.broadcast %cst_74 : f32 to vector<1x80xf32>
    %231 = arith.subf %230, %229 : vector<1x80xf32>
    %232 = arith.mulf %231, %225 : vector<1x80xf32>
    %c-1_i32_75 = arith.constant -1 : i32
    %233 = vector.broadcast %c-1_i32_75 : i32 to vector<1x80xi32>
    %234 = arith.cmpi ne, %206, %233 : vector<1x80xi32>
    %235 = arith.extui %234 : vector<1x80xi1> to vector<1x80xi32>
    %236 = arith.sitofp %235 : vector<1x80xi32> to vector<1x80xf32>
    %237 = arith.mulf %232, %236 : vector<1x80xf32>
    %238 = vector.shape_cast %237 : vector<1x80xf32> to vector<1x1x80xf32>
    %cst_76 = arith.constant dense<0.000000e+00> : vector<1xf32>
    %239 = vector.multi_reduction <add>, %238, %cst_76 [1, 2] : vector<1x1x80xf32> to vector<1xf32>
    %240 = vector.shape_cast %239 : vector<1xf32> to vector<1x1x1xf32>
    %241 = vector.extract %240[0, 0, 0] : f32 from vector<1x1x1xf32>
    %242 = vector.broadcast %241 : f32 to vector<1x1xf32>
    %243 = vector.shape_cast %236 : vector<1x80xf32> to vector<1x1x80xf32>
    %cst_77 = arith.constant dense<0.000000e+00> : vector<1xf32>
    %244 = vector.multi_reduction <add>, %243, %cst_77 [1, 2] : vector<1x1x80xf32> to vector<1xf32>
    %245 = vector.shape_cast %244 : vector<1xf32> to vector<1x1x1xf32>
    %246 = vector.extract %245[0, 0, 0] : f32 from vector<1x1x1xf32>
    %247 = vector.broadcast %246 : f32 to vector<1x1xf32>
    %248 = arith.divf %242, %247 : vector<1x1xf32>
    %249 = arith.addf %204, %248 : vector<1x1xf32>
    %c0_78 = arith.constant 0 : index
    %c0_79 = arith.constant 0 : index
    %250 = vector.load %arg15[%c0_78, %c0_79] : memref<4x80xf32, #tpu.memory_space<vmem>>, vector<4x80xf32>
    %c0_80 = arith.constant 0 : index
    %c0_81 = arith.constant 0 : index
    %251 = vector.load %arg16[%c0_80, %c0_81] : memref<1x80xi32, #tpu.memory_space<vmem>>, vector<1x80xi32>
    %cst_82 = arith.constant dense<0xFF800000> : vector<80xf32>
    %252 = vector.multi_reduction <maximumf>, %250, %cst_82 [0] : vector<4x80xf32> to vector<80xf32>
    %253 = vector.shape_cast %252 : vector<80xf32> to vector<1x80xf32>
    %254 = vector.broadcast %253 : vector<1x80xf32> to vector<4x80xf32>
    %255 = arith.subf %250, %254 : vector<4x80xf32>
    %256 = math.exp %255 : vector<4x80xf32>
    %cst_83 = arith.constant dense<0.000000e+00> : vector<80xf32>
    %257 = vector.multi_reduction <add>, %256, %cst_83 [0] : vector<4x80xf32> to vector<80xf32>
    %258 = vector.shape_cast %257 : vector<80xf32> to vector<1x80xf32>
    %259 = math.log %258 : vector<1x80xf32>
    %260 = arith.addf %253, %259 : vector<1x80xf32>
    %261 = vector.broadcast %260 : vector<1x80xf32> to vector<4x80xf32>
    %262 = arith.subf %250, %261 : vector<4x80xf32>
    %263 = tpu.iota {dimensions = array<i32: 0>} : vector<4x80xi32>
    %264 = vector.broadcast %251 : vector<1x80xi32> to vector<4x80xi32>
    %265 = arith.cmpi eq, %263, %264 : vector<4x80xi32>
    %266 = arith.extui %265 : vector<4x80xi1> to vector<4x80xi32>
    %267 = arith.sitofp %266 : vector<4x80xi32> to vector<4x80xf32>
    %268 = arith.mulf %267, %262 : vector<4x80xf32>
    %cst_84 = arith.constant dense<0.000000e+00> : vector<80xf32>
    %269 = vector.multi_reduction <add>, %268, %cst_84 [0] : vector<4x80xf32> to vector<80xf32>
    %270 = vector.shape_cast %269 : vector<80xf32> to vector<1x80xf32>
    %271 = math.exp %270 : vector<1x80xf32>
    %cst_85 = arith.constant 1.000000e+00 : f32
    %272 = vector.broadcast %cst_85 : f32 to vector<1x80xf32>
    %273 = arith.subf %272, %271 : vector<1x80xf32>
    %274 = arith.mulf %273, %273 : vector<1x80xf32>
    %cst_86 = arith.constant 0.000000e+00 : f32
    %275 = vector.broadcast %cst_86 : f32 to vector<1x80xf32>
    %276 = arith.subf %275, %274 : vector<1x80xf32>
    %277 = arith.mulf %276, %270 : vector<1x80xf32>
    %c-1_i32_87 = arith.constant -1 : i32
    %278 = vector.broadcast %c-1_i32_87 : i32 to vector<1x80xi32>
    %279 = arith.cmpi ne, %251, %278 : vector<1x80xi32>
    %280 = arith.extui %279 : vector<1x80xi1> to vector<1x80xi32>
    %281 = arith.sitofp %280 : vector<1x80xi32> to vector<1x80xf32>
    %282 = arith.mulf %277, %281 : vector<1x80xf32>
    %283 = vector.shape_cast %282 : vector<1x80xf32> to vector<1x1x80xf32>
    %cst_88 = arith.constant dense<0.000000e+00> : vector<1xf32>
    %284 = vector.multi_reduction <add>, %283, %cst_88 [1, 2] : vector<1x1x80xf32> to vector<1xf32>
    %285 = vector.shape_cast %284 : vector<1xf32> to vector<1x1x1xf32>
    %286 = vector.extract %285[0, 0, 0] : f32 from vector<1x1x1xf32>
    %287 = vector.broadcast %286 : f32 to vector<1x1xf32>
    %288 = vector.shape_cast %281 : vector<1x80xf32> to vector<1x1x80xf32>
    %cst_89 = arith.constant dense<0.000000e+00> : vector<1xf32>
    %289 = vector.multi_reduction <add>, %288, %cst_89 [1, 2] : vector<1x1x80xf32> to vector<1xf32>
    %290 = vector.shape_cast %289 : vector<1xf32> to vector<1x1x1xf32>
    %291 = vector.extract %290[0, 0, 0] : f32 from vector<1x1x1xf32>
    %292 = vector.broadcast %291 : f32 to vector<1x1xf32>
    %293 = arith.divf %287, %292 : vector<1x1xf32>
    %294 = arith.addf %249, %293 : vector<1x1xf32>
    %cst_90 = arith.constant 0.0939945355 : f32
    %295 = vector.broadcast %cst_90 : f32 to vector<1x1xf32>
    %296 = arith.mulf %295, %294 : vector<1x1xf32>
    %297 = arith.addf %158, %296 : vector<1x1xf32>
    %c0_91 = arith.constant 0 : index
    %c0_92 = arith.constant 0 : index
    %298 = vector.load %arg17[%c0_91, %c0_92] : memref<1x1xf32, #tpu.memory_space<vmem>>, vector<1x1xf32>
    tpu.vector_store %arg17[%c0_91, %c0_92], %297 {strides = array<i32>} : memref<1x1xf32, #tpu.memory_space<vmem>>, vector<1x1xf32>,
    return
  }
  func.func @transform_0(%arg0: i32) -> (i32, i32) {
    %c0_i32 = arith.constant 0 : i32
    %c0_i32_0 = arith.constant 0 : i32
    %c0_i32_1 = arith.constant 0 : i32
    return %c0_i32, %c0_i32_0 : i32, i32
  }
  func.func @transform_1(%arg0: i32) -> (i32, i32) {
    %c0_i32 = arith.constant 0 : i32
    %c0_i32_0 = arith.constant 0 : i32
    %c0_i32_1 = arith.constant 0 : i32
    return %c0_i32, %c0_i32_0 : i32, i32
  }
  func.func @transform_2(%arg0: i32) -> (i32, i32) {
    %c0_i32 = arith.constant 0 : i32
    %c0_i32_0 = arith.constant 0 : i32
    %c0_i32_1 = arith.constant 0 : i32
    return %c0_i32, %c0_i32_0 : i32, i32
  }
  func.func @transform_3(%arg0: i32) -> (i32, i32) {
    %c0_i32 = arith.constant 0 : i32
    %c0_i32_0 = arith.constant 0 : i32
    %c0_i32_1 = arith.constant 0 : i32
    return %c0_i32, %c0_i32_0 : i32, i32
  }
  func.func @transform_4(%arg0: i32) -> (i32, i32) {
    %c0_i32 = arith.constant 0 : i32
    %c0_i32_0 = arith.constant 0 : i32
    %c0_i32_1 = arith.constant 0 : i32
    return %c0_i32, %c0_i32_0 : i32, i32
  }
  func.func @transform_5(%arg0: i32) -> (i32, i32) {
    %c0_i32 = arith.constant 0 : i32
    %c0_i32_0 = arith.constant 0 : i32
    %c0_i32_1 = arith.constant 0 : i32
    return %c0_i32, %c0_i32_0 : i32, i32
  }
  func.func @transform_6(%arg0: i32) -> (i32, i32) {
    %c0_i32 = arith.constant 0 : i32
    %c0_i32_0 = arith.constant 0 : i32
    %c0_i32_1 = arith.constant 0 : i32
    return %c0_i32, %c0_i32_0 : i32, i32
  }
  func.func @transform_7(%arg0: i32) -> (i32, i32) {
    %c0_i32 = arith.constant 0 : i32
    %c0_i32_0 = arith.constant 0 : i32
    %c0_i32_1 = arith.constant 0 : i32
    return %c0_i32, %c0_i32_0 : i32, i32
  }
  func.func @transform_8(%arg0: i32) -> (i32, i32) {
    %c0_i32 = arith.constant 0 : i32
    %c0_i32_0 = arith.constant 0 : i32
    %c0_i32_1 = arith.constant 0 : i32
    return %c0_i32, %c0_i32_0 : i32, i32
  }
  func.func @transform_9(%arg0: i32) -> (i32, i32) {
    %c0_i32 = arith.constant 0 : i32
    %c0_i32_0 = arith.constant 0 : i32
    %c0_i32_1 = arith.constant 0 : i32
    return %c0_i32, %c0_i32_0 : i32, i32
  }
  func.func @transform_10(%arg0: i32) -> (i32, i32) {
    %c0_i32 = arith.constant 0 : i32
    %c0_i32_0 = arith.constant 0 : i32
    %c0_i32_1 = arith.constant 0 : i32
    return %c0_i32, %c0_i32_0 : i32, i32
  }
  func.func @transform_11(%arg0: i32) -> (i32, i32) {
    %c0_i32 = arith.constant 0 : i32
    %c0_i32_0 = arith.constant 0 : i32
    %c0_i32_1 = arith.constant 0 : i32
    return %c0_i32, %c0_i32_0 : i32, i32
  }
  func.func @transform_12(%arg0: i32) -> (i32, i32) {
    %c0_i32 = arith.constant 0 : i32
    %c0_i32_0 = arith.constant 0 : i32
    %c0_i32_1 = arith.constant 0 : i32
    return %c0_i32, %c0_i32_0 : i32, i32
  }
  func.func @transform_13(%arg0: i32) -> (i32, i32) {
    %c0_i32 = arith.constant 0 : i32
    %c0_i32_0 = arith.constant 0 : i32
    %c0_i32_1 = arith.constant 0 : i32
    return %c0_i32, %c0_i32_0 : i32, i32
  }
  func.func @transform_14(%arg0: i32) -> (i32, i32) {
    %c0_i32 = arith.constant 0 : i32
    %c0_i32_0 = arith.constant 0 : i32
    %c0_i32_1 = arith.constant 0 : i32
    return %c0_i32, %c0_i32_0 : i32, i32
  }
  func.func @transform_15(%arg0: i32) -> (i32, i32) {
    %c0_i32 = arith.constant 0 : i32
    %c0_i32_0 = arith.constant 0 : i32
    %c0_i32_1 = arith.constant 0 : i32
    return %c0_i32, %c0_i32_0 : i32, i32
  }
  func.func @transform_16(%arg0: i32) -> (i32, i32) {
    %c0_i32 = arith.constant 0 : i32
    %c0_i32_0 = arith.constant 0 : i32
    %c0_i32_1 = arith.constant 0 : i32
    return %c0_i32, %c0_i32_0 : i32, i32
  }
}

</mosaic_0001>

<llo_original>
// kernel: tpu_custom_call.1
$region0: #{tpu_custom_call.1}
  #allocation0 [shape = 'u32[]', space=smem, size = 0x4, offset = 0x4, fixed_abs, tag = 'smem constant byte address 0x4 - core index']
  #allocation1 [shape = 'u32[144,128]{1,0:T(1,128)}', space=vmem, size = 0x12000, scoped, tag = 'internal scratch']
  %s0 = inlined_call_operand.vmem [shape: f32[2,8], index: 0, kind: input, shape index: {}]
  %s1 = inlined_call_operand.hbm [shape: s32[1,8], index: 1, kind: input, shape index: {}]
  %s2 = inlined_call_operand.hbm [shape: f32[1,8], index: 2, kind: input, shape index: {}]
  %s3 = inlined_call_operand.vmem [shape: f32[8,1], index: 3, kind: input, shape index: {}]
  %s4 = inlined_call_operand.vmem [shape: f32[1,8], index: 4, kind: input, shape index: {}]
  %s5 = inlined_call_operand.vmem [shape: f32[8,1], index: 5, kind: input, shape index: {}]
  %s6 = inlined_call_operand.vmem [shape: f32[1,8], index: 6, kind: input, shape index: {}]
  %s7 = inlined_call_operand.vmem [shape: f32[8,1], index: 7, kind: input, shape index: {}]
  %s8 = inlined_call_operand.vmem [shape: f32[8,32], index: 8, kind: input, shape index: {}]
  %s9 = inlined_call_operand.vmem [shape: f32[8,32], index: 9, kind: input, shape index: {}]
  %s10 = inlined_call_operand.vmem [shape: f32[5,48], index: 10, kind: input, shape index: {}]
  %s11 = inlined_call_operand.vmem [shape: s32[1,48], index: 11, kind: input, shape index: {}]
  %s12 = inlined_call_operand.vmem [shape: f32[4,80], index: 12, kind: input, shape index: {}]
  %s13 = inlined_call_operand.vmem [shape: s32[1,80], index: 13, kind: input, shape index: {}]
  %s14 = inlined_call_operand.vmem [shape: f32[4,80], index: 14, kind: input, shape index: {}]
  %s15 = inlined_call_operand.vmem [shape: s32[1,80], index: 15, kind: input, shape index: {}]
  %s16 = inlined_call_operand.hbm [shape: f32[1,1], index: 16, kind: output, shape index: {}]
  %s17 = sld [smem:[#allocation0]]
  $region82: #{tpu_custom_call.1} parent=0
    _
  %s19 = ssub.s32 1, %s17
  %s20 = scalar_select 0, %s19, %s17
  $region1: #{tpu_custom_call.1} parent=0
    #allocation2 [shape = 'u8[512]{0}', space=vmem, size = 0x400, scoped, tag = 'input window, operand 1, single buffered']
    #allocation3 [shape = 's32[1]{0}', space=sflag, size = 0x4, scoped, tag = 'scoped memory for tpu_custom_call.1']
    #allocation4 [shape = 's32[1]{0}', space=sflag, size = 0x4, scoped, tag = 'scoped memory for tpu_custom_call.1']
    #allocation5 [shape = 'u8[512]{0}', space=vmem, size = 0x400, scoped, tag = 'input window, operand 2, single buffered']
    #allocation6 [shape = 's32[1]{0}', space=sflag, size = 0x4, scoped, tag = 'scoped memory for tpu_custom_call.1']
    #allocation7 [shape = 'u8[512]{0}', space=vmem, size = 0x400, scoped, tag = 'output window, operand 0, single buffered']
    %21 = vsyncpa [#allocation3], 0
    %22 = vsyncpa [#allocation6], 0
    %23 = vsyncpa [#allocation4], 0
    // Predicated region
    $region2: #{tpu_custom_call.1} parent=1 // pred_check
      _
    $region3: #{tpu_custom_call.1} parent=1 // pred_check_branch
      %25 = sbr.rel (0) target = $region5
    $region4: #{tpu_custom_call.1} parent=1 // pred_region
      _
    $region5: #{tpu_custom_call.1} parent=1 // pred_fallthru
      _
    // Predicated region
    $region6: #{tpu_custom_call.1} parent=1 // pred_check
      _
    $region7: #{tpu_custom_call.1} parent=1 // pred_check_branch
      %27 = sbr.rel (0) target = $region9
    $region8: #{tpu_custom_call.1} parent=1 // pred_region
      %s29 = ssub.s32 16, 16
      %30 = vsyncadd [#allocation3], %s29
      %s32 = sshll.u32 [#allocation2], 4
      %s33 = int_to_ptr.vmem [resolvable:$true] %s32
      %35 = dma.hbm_to_vmem [thread:$0]  %s1, 16, %s33, [#allocation3]
    $region9: #{tpu_custom_call.1} parent=1 // pred_fallthru
      _
    // Predicated region
    $region10: #{tpu_custom_call.1} parent=1 // pred_check
      _
    $region11: #{tpu_custom_call.1} parent=1 // pred_check_branch
      %37 = sbr.rel (0) target = $region13
    $region12: #{tpu_custom_call.1} parent=1 // pred_region
      %s39 = ssub.s32 16, 16
      %40 = vsyncadd [#allocation6], %s39
      %s42 = sshll.u32 [#allocation5], 4
      %s43 = int_to_ptr.vmem [resolvable:$true] %s42
      %45 = dma.hbm_to_vmem [thread:$0]  %s2, 16, %s43, [#allocation6]
    $region13: #{tpu_custom_call.1} parent=1 // pred_fallthru
      _
    // Predicated region
    $region14: #{tpu_custom_call.1} parent=1 // pred_check
      _
    $region15: #{tpu_custom_call.1} parent=1 // pred_check_branch
      %47 = sbr.rel (0) target = $region17
    $region16: #{tpu_custom_call.1} parent=1 // pred_region
      _
    $region17: #{tpu_custom_call.1} parent=1 // pred_fallthru
      _
    // Predicated region
    $region18: #{tpu_custom_call.1} parent=1 // pred_check
      _
    $region19: #{tpu_custom_call.1} parent=1 // pred_check_branch
      %49 = sbr.rel (0) target = $region21
    $region20: #{tpu_custom_call.1} parent=1 // pred_region
      _
    $region21: #{tpu_custom_call.1} parent=1 // pred_fallthru
      _
    // Predicated region
    $region22: #{tpu_custom_call.1} parent=1 // pred_check
      _
    $region23: #{tpu_custom_call.1} parent=1 // pred_check_branch
      %51 = sbr.rel (0) target = $region25
    $region24: #{tpu_custom_call.1} parent=1 // pred_region
      _
    $region25: #{tpu_custom_call.1} parent=1 // pred_fallthru
      _
    // Predicated region
    $region26: #{tpu_custom_call.1} parent=1 // pred_check
      _
    $region27: #{tpu_custom_call.1} parent=1 // pred_check_branch
      %53 = sbr.rel (0) target = $region29
    $region28: #{tpu_custom_call.1} parent=1 // pred_region
      _
    $region29: #{tpu_custom_call.1} parent=1 // pred_fallthru
      _
    // Predicated region
    $region30: #{tpu_custom_call.1} parent=1 // pred_check
      _
    $region31: #{tpu_custom_call.1} parent=1 // pred_check_branch
      %55 = sbr.rel (0) target = $region33
    $region32: #{tpu_custom_call.1} parent=1 // pred_region
      _
    $region33: #{tpu_custom_call.1} parent=1 // pred_fallthru
      _
    // Predicated region
    $region34: #{tpu_custom_call.1} parent=1 // pred_check
      _
    $region35: #{tpu_custom_call.1} parent=1 // pred_check_branch
      %57 = sbr.rel (0) target = $region37
    $region36: #{tpu_custom_call.1} parent=1 // pred_region
      _
    $region37: #{tpu_custom_call.1} parent=1 // pred_fallthru
      _
    // Predicated region
    $region38: #{tpu_custom_call.1} parent=1 // pred_check
      _
    $region39: #{tpu_custom_call.1} parent=1 // pred_check_branch
      %59 = sbr.rel (0) target = $region41
    $region40: #{tpu_custom_call.1} parent=1 // pred_region
      _
    $region41: #{tpu_custom_call.1} parent=1 // pred_fallthru
      _
    // Predicated region
    $region42: #{tpu_custom_call.1} parent=1 // pred_check
      _
    $region43: #{tpu_custom_call.1} parent=1 // pred_check_branch
      %61 = sbr.rel (0) target = $region45
    $region44: #{tpu_custom_call.1} parent=1 // pred_region
      _
    $region45: #{tpu_custom_call.1} parent=1 // pred_fallthru
      _
    // Predicated region
    $region46: #{tpu_custom_call.1} parent=1 // pred_check
      _
    $region47: #{tpu_custom_call.1} parent=1 // pred_check_branch
      %63 = sbr.rel (0) target = $region49
    $region48: #{tpu_custom_call.1} parent=1 // pred_region
      _
    $region49: #{tpu_custom_call.1} parent=1 // pred_fallthru
      _
    // Predicated region
    $region50: #{tpu_custom_call.1} parent=1 // pred_check
      _
    $region51: #{tpu_custom_call.1} parent=1 // pred_check_branch
      %65 = sbr.rel (0) target = $region53
    $region52: #{tpu_custom_call.1} parent=1 // pred_region
      _
    $region53: #{tpu_custom_call.1} parent=1 // pred_fallthru
      _
    // Predicated region
    $region54: #{tpu_custom_call.1} parent=1 // pred_check
      _
    $region55: #{tpu_custom_call.1} parent=1 // pred_check_branch
      %67 = sbr.rel (0) target = $region57
    $region56: #{tpu_custom_call.1} parent=1 // pred_region
      _
    $region57: #{tpu_custom_call.1} parent=1 // pred_fallthru
      _
    // Predicated region
    $region58: #{tpu_custom_call.1} parent=1 // pred_check
      _
    $region59: #{tpu_custom_call.1} parent=1 // pred_check_branch
      %69 = sbr.rel (0) target = $region61
    $region60: #{tpu_custom_call.1} parent=1 // pred_region
      _
    $region61: #{tpu_custom_call.1} parent=1 // pred_fallthru
      _
    // Predicated region
    $region62: #{tpu_custom_call.1} parent=1 // pred_check
      _
    $region63: #{tpu_custom_call.1} parent=1 // pred_check_branch
      %71 = sbr.rel (0) target = $region65
    $region64: #{tpu_custom_call.1} parent=1 // pred_region
      _
    $region65: #{tpu_custom_call.1} parent=1 // pred_fallthru
      _
    // Predicated region
    $region66: #{tpu_custom_call.1} parent=1 // pred_check
      _
    $region67: #{tpu_custom_call.1} parent=1 // pred_check_branch
      %73 = sbr.rel (0) target = $region69
    $region68: #{tpu_custom_call.1} parent=1 // pred_region
      %74 = dma.done [#allocation3], 16
    $region69: #{tpu_custom_call.1} parent=1 // pred_fallthru
      _
    // Predicated region
    $region70: #{tpu_custom_call.1} parent=1 // pred_check
      _
    $region71: #{tpu_custom_call.1} parent=1 // pred_check_branch
      %76 = sbr.rel (0) target = $region73
    $region72: #{tpu_custom_call.1} parent=1 // pred_region
      %77 = dma.done [#allocation6], 16
    $region73: #{tpu_custom_call.1} parent=1 // pred_fallthru
      _
    %v78 = vld [vmem:[%s0] sm:$0x3]
    %v79 = vld [vmem:[#allocation2] sm:$0x1]
    %v81 = vrot.slane %v78, 1
    %v83 = vsub.f32 %v78, %v81
    %vm84 = vcmp.ne.s32.totalorder %v79, 4294967295
    %v85 = vsel %vm84, 1, 0
    %v86 = vcvt.s32.f32 %v85
    %vm87 = vcmp.eq.s32.totalorder %v79, 0
    %v88 = vsub.f32 0.0, %v83
    %v89 = vsel %vm87, %v83, %v88
    %v90 = vmin.f32 %v89, 0.0
    %v91 = vand.u32 2147483647, %v89
    %v92 = vsub.f32 0.0, %v91
    %v93 = vmul.f32 %v92, 1.442695
    %v94 = vpow.pop %v93
    %v95 = vadd.f32 %v94, 1.0
    %v96 = vlog2.pop %v95
    %v97 = vmul.f32 %v96, 0.6931472
    %v98 = vsub.f32 %v90, %v97
    %v99 = vmul.f32 %v98, 1.442695
    %v100 = vpow.pop %v99
    %v101 = vsub.f32 1.0, %v100
    %v102 = vmul.f32 %v101, %v101
    %v103 = vsub.f32 0.0, %v102
    %v104 = vmul.f32 %v103, %v98
    %v105 = vmul.f32 %v104, %v86
    %vm106 = vcmask 57344
    %v107 = vsel %vm106, %v105, 0.0
    %108 = vadd.xlane.f32.xlu0 %v107
    %v109 = vpop.xlane.xlu0 %108
    %v110 = vrot.slane %v109, 4
    %v111 = vadd.f32 %v109, %v110
    %v112 = vrot.slane %v111, 2
    %v113 = vadd.f32 %v111, %v112
    %v114 = vrot.slane %v113, 1
    %v115 = vadd.f32 %v113, %v114
    %s116 = vtos %v115
    %v117 = vstv %s116
    %v118 = vsel %vm106, %v86, 0.0
    %119 = vadd.xlane.f32.xlu0 %v118
    %v120 = vpop.xlane.xlu0 %119
    %v121 = vrot.slane %v120, 4
    %v122 = vadd.f32 %v120, %v121
    %v123 = vrot.slane %v122, 2
    %v124 = vadd.f32 %v122, %v123
    %v125 = vrot.slane %v124, 1
    %v126 = vadd.f32 %v124, %v125
    %s127 = vtos %v126
    %v128 = vstv %s127
    %v129 = vrcp.pop %v128
    %v130 = vmul.f32 %v117, %v129
    %v131 = vld [vmem:[#allocation5] sm:$0x1]
    %v132 = vld [vmem:[%s3] sm:$0xff]
    %v133 = vld [vmem:[%s4] sm:$0x1]
    %v134 = vld [vmem:[%s5] sm:$0xff]
    %v135 = vld [vmem:[%s6] sm:$0x1]
    %v136 = vld [vmem:[%s7] sm:$0xff]
    %v137 = vld [vmem:[%s8] sm:$0xff]
    %v138 = vld [vmem:[%s9] sm:$0xff]
    %v139 = vmul.f32 %v88, 1.442695
    %v140 = vpow.pop %v139
    %v141 = vadd.f32 %v140, 1.0
    %v142 = vrcp.pop %v141
    %v143 = vmul.f32 1.0, %v142
    %v145 = vlaneseq
    %v146 = vshrl.u32 %v145, 7
    %v147 = vsub.s32 0, %v146
    %v148 = vrot.slane %v131, %v147
    %151 = vset.pattern.permute.xlu0 0
    %152 = vperm.xlu0 %151, %v132
    %v153 = vpop.permute.xlu0 %152
    %vm155 = vcmp.ge.f32.partialorder %v148, %v153
    %v156 = vsel %vm155, 1, 0
    %v157 = vcvt.s32.f32 %v156
    %v158 = vmul.f32 %v143, 1.442695
    %v159 = vpow.pop %v158
    %v160 = vlaneseq
    %v161 = vshrl.u32 %v160, 7
    %v162 = vsub.s32 0, %v161
    %v163 = vrot.slane %v159, %v162
    %v164 = vmul.f32 %v157, %v163
    %vm165 = vcmask 64512
    %v166 = vsel %vm165, %v164, 0.0
    %167 = vadd.xlane.f32.xlu0 %v166
    %v168 = vpop.xlane.xlu0 %167
    %v169 = vmul.f32 %v133, %v143
    %v170 = vsel %vm106, %v169, 0.0
    %171 = vadd.xlane.f32.xlu0 %v170
    %v172 = vpop.xlane.xlu0 %171
    %v173 = vrot.slane %v172, 4
    %v174 = vadd.f32 %v172, %v173
    %v175 = vrot.slane %v174, 2
    %v176 = vadd.f32 %v174, %v175
    %v177 = vrot.slane %v176, 1
    %v178 = vadd.f32 %v176, %v177
    %s179 = vtos %v178
    %v180 = vstv %s179
    %v181 = vlog2.pop %v168
    %v182 = vmul.f32 %v181, 0.6931472
    %v183 = vmul.f32 %v134, %v182
    %vm184 = vcmask 7168
    %v185 = vsel %vm184, %v183, 0.0
    %186 = vadd.xlane.f32.xlu0 %v185
    %v187 = vpop.xlane.xlu0 %186
    %v188 = vrot.slane %v187, 4
    %v189 = vadd.f32 %v187, %v188
    %v190 = vrot.slane %v189, 2
    %v191 = vadd.f32 %v189, %v190
    %v192 = vrot.slane %v191, 1
    %v193 = vadd.f32 %v191, %v192
    %s194 = vtos %v193
    %v195 = vstv %s194
    %v196 = vsub.f32 %v180, %v195
    %v197 = vsel %vm106, %v133, 0.0
    %198 = vadd.xlane.f32.xlu0 %v197
    %v199 = vpop.xlane.xlu0 %198
    %v200 = vrot.slane %v199, 4
    %v201 = vadd.f32 %v199, %v200
    %v202 = vrot.slane %v201, 2
    %v203 = vadd.f32 %v201, %v202
    %v204 = vrot.slane %v203, 1
    %v205 = vadd.f32 %v203, %v204
    %s206 = vtos %v205
    %v207 = vstv %s206
    %v208 = vrcp.pop %v207
    %v209 = vmul.f32 %v196, %v208
    %v210 = vsub.f32 0.0, %v209
    %vm211 = vcmp.gt.f32.partialorder %v207, 0.0
    %v212 = vsel %vm211, %v210, 0.0
    %v213 = vadd.f32 %v130, %v212
    %v214 = vmul.f32 %v137, %v137
    %vm215 = vcmask 261120
    %v216 = vsel %vm215, %v214, 0.0
    %217 = vadd.xlane.f32.xlu0 %v216
    %v218 = vpop.xlane.xlu0 %217
    %v219 = vrsqrt.pop %v218
    %v220 = vmul.f32 %v218, %v219
    %vm221 = vcmp.eq.f32.partialorder %v218, inf
    %v222 = vsel %vm221, %v218, %v220
    %vm223 = vcmp.eq.f32.partialorder %v218, 0.0
    %v224 = vand.u32 %v218, 2147483648
    %v225 = vsel %vm223, %v224, %v222
    %v226 = vmax.f32 %v225, 1e-08
    %v227 = vmul.f32 %v138, %v138
    %v228 = vsel %vm215, %v227, 0.0
    %229 = vadd.xlane.f32.xlu0 %v228
    %v230 = vpop.xlane.xlu0 %229
    %v231 = vrsqrt.pop %v230
    %v232 = vmul.f32 %v230, %v231
    %vm233 = vcmp.eq.f32.partialorder %v230, inf
    %v234 = vsel %vm233, %v230, %v232
    %vm235 = vcmp.eq.f32.partialorder %v230, 0.0
    %v236 = vand.u32 %v230, 2147483648
    %v237 = vsel %vm235, %v236, %v234
    %v238 = vmax.f32 %v237, 1e-08
    %v239 = vrcp.pop %v226
    %v240 = vmul.f32 %v137, %v239
    %v241 = vrcp.pop %v238
    %v242 = vmul.f32 %v138, %v241
    %v244 = vsel %vm215, %v240, 0
    %v247 = vsel %vm215, %v242, 0
    %249 = vmatprep.subr.mxu0 0.0
    %250 = vmatpush1.xpose.msra.mxu0 %v247
    %251 = vmatprep.subr.mxu0 0.0
    %252 = vmatpush1.xpose.msra.mxu0 0.0
    %253 = vmatprep.subr.mxu0 0.0
    %254 = vmatpush1.xpose.msra.mxu0 0.0
    %255 = vmatprep.subr.mxu0 0.0
    %256 = vmatpush1.xpose.msra.mxu0 0.0
    %257 = vmatprep.subr.mxu0 0.0
    %258 = vmatpush1.xpose.msra.mxu0 0.0
    %259 = vmatprep.subr.mxu0 0.0
    %260 = vmatpush1.xpose.msra.mxu0 0.0
    %261 = vmatprep.subr.mxu0 0.0
    %262 = vmatpush1.xpose.msra.mxu0 0.0
    %263 = vmatprep.subr.mxu0 0.0
    %264 = vmatpush1.xpose.msra.mxu0 0.0
    %265 = vmatprep.subr.mxu0 0.0
    %266 = vmatpush1.xpose.msra.mxu0 0.0
    %267 = vmatprep.subr.mxu0 0.0
    %268 = vmatpush1.xpose.msra.mxu0 0.0
    %269 = vmatprep.subr.mxu0 0.0
    %270 = vmatpush1.xpose.msra.mxu0 0.0
    %271 = vmatprep.subr.mxu0 0.0
    %272 = vmatpush1.xpose.msra.mxu0 0.0
    %273 = vmatprep.subr.mxu0 0.0
    %274 = vmatpush1.xpose.msra.mxu0 0.0
    %275 = vmatprep.subr.mxu0 0.0
    %276 = vmatpush1.xpose.msra.mxu0 0.0
    %277 = vmatprep.subr.mxu0 0.0
    %278 = vmatpush1.xpose.msra.mxu0 0.0
    %279 = vmatprep.subr.mxu0 0.0
    %280 = vmatpush1.xpose.msra.mxu0 0.0
    %281 = vmatprep.subr.mxu0 0.0
    %282 = vmatpush1.xpose.msra.mxu0 0.0
    %283 = vmatprep.subr.mxu0 0.0
    %284 = vmatpush1.xpose.msra.mxu0 0.0
    %285 = vmatprep.subr.mxu0 0.0
    %286 = vmatpush1.xpose.msra.mxu0 0.0
    %287 = vmatprep.subr.mxu0 0.0
    %288 = vmatpush1.xpose.msra.mxu0 0.0
    %289 = vmatprep.subr.mxu0 0.0
    %290 = vmatpush1.xpose.msra.mxu0 0.0
    %291 = vmatprep.subr.mxu0 0.0
    %292 = vmatpush1.xpose.msra.mxu0 0.0
    %293 = vmatprep.subr.mxu0 0.0
    %294 = vmatpush1.xpose.msra.mxu0 0.0
    %295 = vmatprep.subr.mxu0 0.0
    %296 = vmatpush1.xpose.msra.mxu0 0.0
    %297 = vmatprep.subr.mxu0 0.0
    %298 = vmatpush1.xpose.msra.mxu0 0.0
    %299 = vmatprep.subr.mxu0 0.0
    %300 = vmatpush1.xpose.msra.mxu0 0.0
    %301 = vmatprep.subr.mxu0 0.0
    %302 = vmatpush1.xpose.msra.mxu0 0.0
    %303 = vmatprep.subr.mxu0 0.0
    %304 = vmatpush1.xpose.msra.mxu0 0.0
    %305 = vmatprep.subr.mxu0 0.0
    %306 = vmatpush1.xpose.msra.mxu0 0.0
    %307 = vmatprep.subr.mxu0 0.0
    %308 = vmatpush1.xpose.msra.mxu0 0.0
    %309 = vmatprep.subr.mxu0 0.0
    %310 = vmatpush1.xpose.msra.mxu0 0.0
    %311 = vmatprep.subr.mxu0 0.0
    %312 = vmatpush1.xpose.msra.mxu0 0.0
    %313 = vmatprep.mubr.f32.mxu0 0.0
    %314 = vmatmul.mubr.f32.gmra.mrb[0].mxu0 %v244
    %v315 = vpop.f32.mrb[0].mxu0
    %v316 = vadd.f32 0.0, %v315
    %v317 = vpop.f32.mrb[0].mxu0
    %318 = vdwg.mxu0
    %v319 = vmul.f32 %v316, 2.0
    %v320 = vsub.f32 1.0, %v319
    %v321 = vlaneseq
    %v322 = vshrl.u32 %v321, 7
    %v323 = vlaneseq
    %v324 = vand.u32 %v323, 127
    %vm325 = vcmp.eq.s32.totalorder %v322, %v324
    %v326 = vsub.f32 0.0, %v320
    %v327 = vsel %vm325, %v326, %v320
    %329 = vset.pattern.permute.xlu0 0
    %330 = vperm.xlu0 %329, %v136
    %v331 = vpop.permute.xlu0 %330
    %v334 = vlaneseq
    %v335 = vshrl.u32 %v334, 7
    %v336 = vsub.s32 0, %v335
    %v337 = vrot.slane %v135, %v336
    %v339 = vmul.f32 %v331, %v337
    %v340 = vmin.f32 %v327, 0.0
    %v341 = vand.u32 2147483647, %v327
    %v342 = vsub.f32 0.0, %v341
    %v343 = vmul.f32 %v342, 1.442695
    %v344 = vpow.pop %v343
    %v345 = vadd.f32 %v344, 1.0
    %v346 = vlog2.pop %v345
    %v347 = vmul.f32 %v346, 0.6931472
    %v348 = vsub.f32 %v340, %v347
    %v349 = vmul.f32 %v348, 1.442695
    %v350 = vpow.pop %v349
    %v351 = vsub.f32 1.0, %v350
    %v352 = vmul.f32 %v351, %v351
    %v353 = vsub.f32 0.0, %v352
    %v354 = vmul.f32 %v353, %v348
    %v355 = vmul.f32 %v354, %v339
    %v356 = vsel %vm165, %v355, 0.0
    %357 = vadd.xlane.f32.xlu0 %v356
    %v358 = vpop.xlane.xlu0 %357
    %v359 = vrot.slane %v358, 4
    %v360 = vadd.f32 %v358, %v359
    %v361 = vrot.slane %v360, 2
    %v362 = vadd.f32 %v360, %v361
    %v363 = vrot.slane %v362, 1
    %v364 = vadd.f32 %v362, %v363
    %s365 = vtos %v364
    %v366 = vstv %s365
    %v367 = vsel %vm165, %v339, 0.0
    %368 = vadd.xlane.f32.xlu0 %v367
    %v369 = vpop.xlane.xlu0 %368
    %v370 = vrot.slane %v369, 4
    %v371 = vadd.f32 %v369, %v370
    %v372 = vrot.slane %v371, 2
    %v373 = vadd.f32 %v371, %v372
    %v374 = vrot.slane %v373, 1
    %v375 = vadd.f32 %v373, %v374
    %s376 = vtos %v375
    %v377 = vstv %s376
    %vm378 = vcmp.gt.f32.partialorder %v377, 0.0
    %v379 = vrcp.pop %v377
    %v380 = vmul.f32 %v366, %v379
    %v381 = vsel %vm378, %v380, 0.0
    %v382 = vadd.f32 %v213, %v381
    %v383 = vld [vmem:[%s10] sm:$0x1f]
    %v384 = vld [vmem:[%s11] sm:$0x1]
    %vm385 = vcmask 389120
    %v386 = vsel %vm385, %v383, -inf
    %v387 = vrot.slane %v386, 4
    %v388 = vmax.f32 %v386, %v387
    %v389 = vrot.slane %v388, 2
    %v390 = vmax.f32 %v388, %v389
    %v391 = vrot.slane %v390, 1
    %v392 = vmax.f32 %v390, %v391
    %v393 = vsub.f32 %v383, %v392
    %v394 = vmul.f32 %v393, 1.442695
    %v395 = vpow.pop %v394
    %v396 = vsel %vm385, %v395, 0.0
    %v397 = vrot.slane %v396, 4
    %v398 = vadd.f32 %v396, %v397
    %v399 = vrot.slane %v398, 2
    %v400 = vadd.f32 %v398, %v399
    %v401 = vrot.slane %v400, 1
    %v402 = vadd.f32 %v400, %v401
    %v403 = vlog2.pop %v402
    %v404 = vmul.f32 %v403, 0.6931472
    %v405 = vadd.f32 %v392, %v404
    %v406 = vsub.f32 %v383, %v405
    %v407 = vlaneseq
    %v408 = vshrl.u32 %v407, 7
    %v409 = vsub.s32 0, %v408
    %v410 = vrot.slane %v384, %v409
    %vm411 = vcmp.eq.s32.totalorder %v322, %v410
    %v412 = vsel %vm411, 1, 0
    %v413 = vcvt.s32.f32 %v412
    %v414 = vmul.f32 %v413, %v406
    %v415 = vsel %vm385, %v414, 0.0
    %v416 = vrot.slane %v415, 4
    %v417 = vadd.f32 %v415, %v416
    %v418 = vrot.slane %v417, 2
    %v419 = vadd.f32 %v417, %v418
    %v420 = vrot.slane %v419, 1
    %v421 = vadd.f32 %v419, %v420
    %v422 = vmul.f32 %v421, 1.442695
    %v423 = vpow.pop %v422
    %v424 = vsub.f32 1.0, %v423
    %v425 = vmul.f32 %v424, %v424
    %v426 = vsub.f32 0.0, %v425
    %v427 = vmul.f32 %v426, %v421
    %vm428 = vcmp.ne.s32.totalorder %v384, 4294967295
    %v429 = vsel %vm428, 1, 0
    %v430 = vcvt.s32.f32 %v429
    %v431 = vmul.f32 %v427, %v430
    %vm432 = vcmask 385024
    %v433 = vsel %vm432, %v431, 0.0
    %434 = vadd.xlane.f32.xlu0 %v433
    %v435 = vpop.xlane.xlu0 %434
    %v436 = vrot.slane %v435, 4
    %v437 = vadd.f32 %v435, %v436
    %v438 = vrot.slane %v437, 2
    %v439 = vadd.f32 %v437, %v438
    %v440 = vrot.slane %v439, 1
    %v441 = vadd.f32 %v439, %v440
    %s442 = vtos %v441
    %v443 = vstv %s442
    %v444 = vsel %vm432, %v430, 0.0
    %445 = vadd.xlane.f32.xlu0 %v444
    %v446 = vpop.xlane.xlu0 %445
    %v447 = vrot.slane %v446, 4
    %v448 = vadd.f32 %v446, %v447
    %v449 = vrot.slane %v448, 2
    %v450 = vadd.f32 %v448, %v449
    %v451 = vrot.slane %v450, 1
    %v452 = vadd.f32 %v450, %v451
    %s453 = vtos %v452
    %v454 = vstv %s453
    %v455 = vrcp.pop %v454
    %v456 = vmul.f32 %v443, %v455
    %v457 = vadd.f32 %v456, 0.0
    %v458 = vld [vmem:[%s12] sm:$0xf]
    %v459 = vld [vmem:[%s13] sm:$0x1]
    %vm460 = vcmask 650240
    %v461 = vsel %vm460, %v458, -inf
    %v462 = vrot.slane %v461, 4
    %v463 = vmax.f32 %v461, %v462
    %v464 = vrot.slane %v463, 2
    %v465 = vmax.f32 %v463, %v464
    %v466 = vrot.slane %v465, 1
    %v467 = vmax.f32 %v465, %v466
    %v468 = vsub.f32 %v458, %v467
    %v469 = vmul.f32 %v468, 1.442695
    %v470 = vpow.pop %v469
    %v471 = vsel %vm460, %v470, 0.0
    %v472 = vrot.slane %v471, 4
    %v473 = vadd.f32 %v471, %v472
    %v474 = vrot.slane %v473, 2
    %v475 = vadd.f32 %v473, %v474
    %v476 = vrot.slane %v475, 1
    %v477 = vadd.f32 %v475, %v476
    %v478 = vlog2.pop %v477
    %v479 = vmul.f32 %v478, 0.6931472
    %v480 = vadd.f32 %v467, %v479
    %v481 = vsub.f32 %v458, %v480
    %v482 = vlaneseq
    %v483 = vshrl.u32 %v482, 7
    %v484 = vsub.s32 0, %v483
    %v485 = vrot.slane %v459, %v484
    %vm486 = vcmp.eq.s32.totalorder %v322, %v485
    %v487 = vsel %vm486, 1, 0
    %v488 = vcvt.s32.f32 %v487
    %v489 = vmul.f32 %v488, %v481
    %v490 = vsel %vm460, %v489, 0.0
    %v491 = vrot.slane %v490, 4
    %v492 = vadd.f32 %v490, %v491
    %v493 = vrot.slane %v492, 2
    %v494 = vadd.f32 %v492, %v493
    %v495 = vrot.slane %v494, 1
    %v496 = vadd.f32 %v494, %v495
    %v497 = vmul.f32 %v496, 1.442695
    %v498 = vpow.pop %v497
    %v499 = vsub.f32 1.0, %v498
    %v500 = vmul.f32 %v499, %v499
    %v501 = vsub.f32 0.0, %v500
    %v502 = vmul.f32 %v501, %v496
    %vm503 = vcmp.ne.s32.totalorder %v459, 4294967295
    %v504 = vsel %vm503, 1, 0
    %v505 = vcvt.s32.f32 %v504
    %v506 = vmul.f32 %v502, %v505
    %vm507 = vcmask 647168
    %v508 = vsel %vm507, %v506, 0.0
    %509 = vadd.xlane.f32.xlu0 %v508
    %v510 = vpop.xlane.xlu0 %509
    %v511 = vrot.slane %v510, 4
    %v512 = vadd.f32 %v510, %v511
    %v513 = vrot.slane %v512, 2
    %v514 = vadd.f32 %v512, %v513
    %v515 = vrot.slane %v514, 1
    %v516 = vadd.f32 %v514, %v515
    %s517 = vtos %v516
    %v518 = vstv %s517
    %v519 = vsel %vm507, %v505, 0.0
    %520 = vadd.xlane.f32.xlu0 %v519
    %v521 = vpop.xlane.xlu0 %520
    %v522 = vrot.slane %v521, 4
    %v523 = vadd.f32 %v521, %v522
    %v524 = vrot.slane %v523, 2
    %v525 = vadd.f32 %v523, %v524
    %v526 = vrot.slane %v525, 1
    %v527 = vadd.f32 %v525, %v526
    %s528 = vtos %v527
    %v529 = vstv %s528
    %v530 = vrcp.pop %v529
    %v531 = vmul.f32 %v518, %v530
    %v532 = vadd.f32 %v457, %v531
    %v533 = vld [vmem:[%s14] sm:$0xf]
    %v534 = vld [vmem:[%s15] sm:$0x1]
    %v535 = vsel %vm460, %v533, -inf
    %v536 = vrot.slane %v535, 4
    %v537 = vmax.f32 %v535, %v536
    %v538 = vrot.slane %v537, 2
    %v539 = vmax.f32 %v537, %v538
    %v540 = vrot.slane %v539, 1
    %v541 = vmax.f32 %v539, %v540
    %v542 = vsub.f32 %v533, %v541
    %v543 = vmul.f32 %v542, 1.442695
    %v544 = vpow.pop %v543
    %v545 = vsel %vm460, %v544, 0.0
    %v546 = vrot.slane %v545, 4
    %v547 = vadd.f32 %v545, %v546
    %v548 = vrot.slane %v547, 2
    %v549 = vadd.f32 %v547, %v548
    %v550 = vrot.slane %v549, 1
    %v551 = vadd.f32 %v549, %v550
    %v552 = vlog2.pop %v551
    %v553 = vmul.f32 %v552, 0.6931472
    %v554 = vadd.f32 %v541, %v553
    %v555 = vsub.f32 %v533, %v554
    %v556 = vlaneseq
    %v557 = vshrl.u32 %v556, 7
    %v558 = vsub.s32 0, %v557
    %v559 = vrot.slane %v534, %v558
    %vm560 = vcmp.eq.s32.totalorder %v322, %v559
    %v561 = vsel %vm560, 1, 0
    %v562 = vcvt.s32.f32 %v561
    %v563 = vmul.f32 %v562, %v555
    %v564 = vsel %vm460, %v563, 0.0
    %v565 = vrot.slane %v564, 4
    %v566 = vadd.f32 %v564, %v565
    %v567 = vrot.slane %v566, 2
    %v568 = vadd.f32 %v566, %v567
    %v569 = vrot.slane %v568, 1
    %v570 = vadd.f32 %v568, %v569
    %v571 = vmul.f32 %v570, 1.442695
    %v572 = vpow.pop %v571
    %v573 = vsub.f32 1.0, %v572
    %v574 = vmul.f32 %v573, %v573
    %v575 = vsub.f32 0.0, %v574
    %v576 = vmul.f32 %v575, %v570
    %vm577 = vcmp.ne.s32.totalorder %v534, 4294967295
    %v578 = vsel %vm577, 1, 0
    %v579 = vcvt.s32.f32 %v578
    %v580 = vmul.f32 %v576, %v579
    %v581 = vsel %vm507, %v580, 0.0
    %582 = vadd.xlane.f32.xlu0 %v581
    %v583 = vpop.xlane.xlu0 %582
    %v584 = vrot.slane %v583, 4
    %v585 = vadd.f32 %v583, %v584
    %v586 = vrot.slane %v585, 2
    %v587 = vadd.f32 %v585, %v586
    %v588 = vrot.slane %v587, 1
    %v589 = vadd.f32 %v587, %v588
    %s590 = vtos %v589
    %v591 = vstv %s590
    %v592 = vsel %vm507, %v579, 0.0
    %593 = vadd.xlane.f32.xlu0 %v592
    %v594 = vpop.xlane.xlu0 %593
    %v595 = vrot.slane %v594, 4
    %v596 = vadd.f32 %v594, %v595
    %v597 = vrot.slane %v596, 2
    %v598 = vadd.f32 %v596, %v597
    %v599 = vrot.slane %v598, 1
    %v600 = vadd.f32 %v598, %v599
    %s601 = vtos %v600
    %v602 = vstv %s601
    %v603 = vrcp.pop %v602
    %v604 = vmul.f32 %v591, %v603
    %v605 = vadd.f32 %v532, %v604
    %v606 = vmul.f32 %v605, 0.093994536
    %v607 = vadd.f32 %v382, %v606
    %vm608 = vcmask 0
    %609 = vst.msk [vmem:[#allocation7] sm:$0x1] %vm608, %v607
    // Predicated region
    $region74: #{tpu_custom_call.1} parent=1 // pred_check
      _
    $region75: #{tpu_custom_call.1} parent=1 // pred_check_branch
      %611 = sbr.rel (0) target = $region77
    $region76: #{tpu_custom_call.1} parent=1 // pred_region
      %s613 = ssub.s32 16, 16
      %614 = vsyncadd [#allocation4], %s613
      %s616 = sshll.u32 [#allocation7], 4
      %s617 = int_to_ptr.vmem [resolvable:$true] %s616
      %619 = dma.vmem_to_hbm [thread:$0]  %s617, 16, %s16, [#allocation4]
    $region77: #{tpu_custom_call.1} parent=1 // pred_fallthru
      _
    // Predicated region
    $region78: #{tpu_custom_call.1} parent=1 // pred_check
      _
    $region79: #{tpu_custom_call.1} parent=1 // pred_check_branch
      %621 = sbr.rel (0) target = $region81
    $region80: #{tpu_custom_call.1} parent=1 // pred_region
      %622 = dma.done [#allocation4], 16
    $region81: #{tpu_custom_call.1} parent=1 // pred_fallthru
      _
    %623 = vsyncpa [#allocation3], 1
    %624 = vsyncpa [#allocation6], 1
    %625 = vsyncpa [#allocation4], 1

</llo_original>
